<compile_context>
chip_gen: v7x
topology: tpu7x:2x2x1
jax: 0.10.0
libtpu: 0.0.40
codegen_flags: <defaults>
</compile_context>

<pallas_src>
import jax
import jax.numpy as jnp
from jax.experimental import pallas as pl
from jax.experimental.pallas import tpu as pltpu


def _round_up(n, m):
    return ((n + m - 1) // m) * m


def _default_bf16_epilogue():
    """bf16 bias/ReLU epilogue only on generations with a bf16 VPU (v6e / v7x)."""
    try:
        kind = jax.devices()[0].device_kind.lower()
    except Exception:
        return False
    return ("v6" in kind) or ("v7" in kind)


def mlp_kernel(x_ref, w1_ref, b1_ref, w2_ref, b2_ref, w3_ref, b3_ref,
               w4_ref, b4_ref, o_ref):
    # Feature-major: every activation is (features, TILE_B); the batch lives in lanes.
    # fc1 + ReLU   (dropout1 = identity at inference)
    h = jnp.dot(w1_ref[...], x_ref[...], preferred_element_type=jnp.float32)   # (128, tb)
    h = jnp.maximum(h.astype(b1_ref.dtype) + b1_ref[...], 0.0).astype(jnp.bfloat16)
    # fc2 + ReLU   (dropout2 = identity)
    h = jnp.dot(w2_ref[...], h, preferred_element_type=jnp.float32)            # (64, tb)
    h = jnp.maximum(h.astype(b2_ref.dtype) + b2_ref[...], 0.0).astype(jnp.bfloat16)
    # fc3 + ReLU   (dropout3 = identity)
    h = jnp.dot(w3_ref[...], h, preferred_element_type=jnp.float32)            # (32, tb)
    h = jnp.maximum(h.astype(b3_ref.dtype) + b3_ref[...], 0.0)
    # fc4 (out_features = 1): 32-deep sublane reduce (avoid an M=1 MXU matmul);
    # b4 is a scalar in SMEM; sigmoid + store are lane-dense over the batch.
    z = jnp.sum(h.astype(jnp.float32) * w4_ref[...], axis=0, keepdims=True) + b4_ref[0]
    o_ref[...] = jax.nn.sigmoid(z)                                             # (1, tb)


def recommendation_nn_forward(x, params, *, max_tile_b=None,
                              vmem_budget_bytes=12 << 20, bf16_epilogue=None):
    """x: (B, input_size) float; params: PyTorch-layout weights w_i (out, in), biases b_i (out,)."""
    B, K = x.shape
    h1, h2, h3 = params["w1"].shape[0], params["w2"].shape[0], params["w3"].shape[0]

    if bf16_epilogue is None:
        bf16_epilogue = _default_bf16_epilogue()
    ep_dtype = jnp.bfloat16 if bf16_epilogue else jnp.float32

    # One-time casts: MXU weights bf16; biases in the epilogue dtype (column vectors so
    # they broadcast across the lane/batch axis); tiny fc4 head stays f32.
    w1 = params["w1"].astype(jnp.bfloat16)                  # (128, K)
    w2 = params["w2"].astype(jnp.bfloat16)                  # (64, 128)
    w3 = params["w3"].astype(jnp.bfloat16)                  # (32, 64)
    b1 = params["b1"].astype(ep_dtype).reshape(h1, 1)
    b2 = params["b2"].astype(ep_dtype).reshape(h2, 1)
    b3 = params["b3"].astype(ep_dtype).reshape(h3, 1)
    w4 = params["w4"].astype(jnp.float32).reshape(h3, 1)    # column for the sublane reduce
    b4 = params["b4"].astype(jnp.float32).reshape(-1)       # (1,) scalar -> SMEM

    # Batch tile: multiple of 128 (batch is the lane axis), sized from a VMEM budget.
    # Per-batch-column VMEM bytes: double-buffered bf16 x (2*2*K) + f32 matmul outputs and
    # bf16 activation copies for each hidden layer (+ fc4 tail, output) -- conservative sum.
    per_col = 4 * K + (h1 + h2 + h3) * 6 + h3 * 4 + 16
    tb_cap = max(128, (vmem_budget_bytes // per_col) // 128 * 128)
    if max_tile_b is not None:
        tb_cap = min(tb_cap, max(128, (max_tile_b // 128) * 128))
    tb = min(tb_cap, _round_up(B, 128))
    if tb > 128:
        # >= 2 grid steps so v7x's two TensorCores both get work (no-op on v5e/v6e).
        tb = min(tb, max(128, _round_up(pl.cdiv(B, 2), 128)))
    b_pad = _round_up(B, tb)

    # Feature-major x: the transpose is fused with the one-time f32->bf16 cast (and the
    # batch padding) into a single pass over x; the kernel then streams lane-dense
    # (K, TILE_B) tiles.  Padded columns are zero and their outputs are sliced off.
    xt = x.astype(jnp.bfloat16).T                           # (K, B)
    if b_pad != B:
        xt = jnp.pad(xt, ((0, 0), (0, b_pad - B)))

    grid = (b_pad // tb,)

    flops = 2 * b_pad * (K * h1 + h1 * h2 + h2 * h3 + h3)
    bytes_accessed = int(
        xt.size * 2                                          # bf16 x stream
        + (w1.size + w2.size + w3.size) * 2                  # bf16 weights (resident)
        + (b1.size + b2.size + b3.size) * jnp.dtype(ep_dtype).itemsize
        + (w4.size + b4.size) * 4
        + b_pad * 4                                          # f32 output row
    )

    est_vmem = per_col * tb + 2 * (w1.size + w2.size + w3.size) * 2 + (1 << 20)
    vmem_limit = int(min(40 << 20, max(24 << 20, 2 * est_vmem)))  # leave v7x 64 MiB headroom

    out = pl.pallas_call(
        mlp_kernel,
        out_shape=jax.ShapeDtypeStruct((1, b_pad), jnp.float32),
        grid_spec=pltpu.PrefetchScalarGridSpec(
            num_scalar_prefetch=0,
            grid=grid,
            in_specs=[
                pl.BlockSpec((K, tb), lambda i: (0, i)),             # x: streamed per tile
                pl.BlockSpec((h1, K), lambda i: (0, 0)),             # w1 (VMEM-resident)
                pl.BlockSpec((h1, 1), lambda i: (0, 0)),             # b1 column
                pl.BlockSpec((h2, h1), lambda i: (0, 0)),            # w2
                pl.BlockSpec((h2, 1), lambda i: (0, 0)),             # b2 column
                pl.BlockSpec((h3, h2), lambda i: (0, 0)),            # w3
                pl.BlockSpec((h3, 1), lambda i: (0, 0)),             # b3 column
                pl.BlockSpec((h3, 1), lambda i: (0, 0)),             # w4 column (sublane reduce)
                pl.BlockSpec(memory_space=pltpu.MemorySpace.SMEM),   # b4 scalar
            ],
            out_specs=pl.BlockSpec((1, tb), lambda i: (0, i)),       # lane-dense output row
        ),
        compiler_params=pltpu.CompilerParams(
            dimension_semantics=("parallel",),
            vmem_limit_bytes=vmem_limit,
        ),
        cost_estimate=pl.CostEstimate(
            flops=flops, transcendentals=2 * b_pad, bytes_accessed=bytes_accessed),
    )(xt, w1, b1, w2, b2, w3, b3, w4, b4)

    return out[0, :B][:, None]                               # (B, 1), matches the module


def init_params(key, input_size):
    """Deterministic PyTorch-style (uniform +-1/sqrt(fan_in)) init; PyTorch (out, in) layout."""
    dims = [(input_size, 128), (128, 64), (64, 32), (32, 1)]
    params = {}
    for i, (fan_in, fan_out) in enumerate(dims, start=1):
        key, kw, kb = jax.random.split(key, 3)
        bound = float(fan_in) ** -0.5
        params[f"w{i}"] = jax.random.uniform(
            kw, (fan_out, fan_in), jnp.float32, minval=-bound, maxval=bound)
        params[f"b{i}"] = jax.random.uniform(
            kb, (fan_out,), jnp.float32, minval=-bound, maxval=bound)
    return params


def reference_forward(x, params):
    h = jnp.maximum(x @ params["w1"].T + params["b1"], 0.0)
    h = jnp.maximum(h @ params["w2"].T + params["b2"], 0.0)
    h = jnp.maximum(h @ params["w3"].T + params["b3"], 0.0)
    return jax.nn.sigmoid(h @ params["w4"].T + params["b4"])


if __name__ == "__main__":
    key = jax.random.PRNGKey(0)
    input_size = 32

    kx, kx2, kp = jax.random.split(key, 3)
    params = init_params(kp, input_size)

    # Small smoke test (single tile, padded 8 -> 128 batch columns).
    x = jax.random.normal(kx, (8, input_size), jnp.float32)
    out = jax.block_until_ready(recommendation_nn_forward(x, params))
    ref = reference_forward(x, params)
    assert out.shape == (8, 1)
    # bf16 inputs/weights (f32 accumulation) -> loosened tolerance vs. the f32 reference.
    assert jnp.allclose(out, ref, atol=2e-2), float(jnp.max(jnp.abs(out - ref)))

    # Multi-tile path: non-multiple batch exercises the grid, padding and output slice.
    x2 = jax.random.normal(kx2, (300, input_size), jnp.float32)
    out2 = jax.block_until_ready(recommendation_nn_forward(x2, params, max_tile_b=128))
    ref2 = reference_forward(x2, params)
    assert out2.shape == (300, 1)
    assert jnp.allclose(out2, ref2, atol=2e-2), float(jnp.max(jnp.abs(out2 - ref2)))

    print("KERNEL_OK")
</pallas_src>

<mosaic_0001>
module attributes {stable_mosaic.version = 11 : i64} {
  func.func @mlp_kernel(%arg0: i32, %arg1: memref<32x128xbf16, #tpu.memory_space<vmem>>, %arg2: memref<128x32xbf16, #tpu.memory_space<vmem>>, %arg3: memref<128x1xf32, #tpu.memory_space<vmem>>, %arg4: memref<64x128xbf16, #tpu.memory_space<vmem>>, %arg5: memref<64x1xf32, #tpu.memory_space<vmem>>, %arg6: memref<32x64xbf16, #tpu.memory_space<vmem>>, %arg7: memref<32x1xf32, #tpu.memory_space<vmem>>, %arg8: memref<32x1xf32, #tpu.memory_space<vmem>>, %arg9: memref<1xf32, #tpu.memory_space<smem>>, %arg10: memref<1x128xf32, #tpu.memory_space<vmem>>) attributes {dimension_semantics = [#tpu.dimension_semantics<parallel>], iteration_bounds = array<i64: 1>, scalar_prefetch = 0 : i64, scratch_operands = 0 : i64, tpu.core_type = #tpu.core_type<tc>, window_params = [{transform_indices = @transform_0, window_bounds = array<i64: 32, 128>}, {pipeline_mode = #tpu.pipeline_mode<synchronous>, transform_indices = @transform_1, window_bounds = array<i64: 128, 32>}, {pipeline_mode = #tpu.pipeline_mode<synchronous>, transform_indices = @transform_2, window_bounds = array<i64: 128, 1>}, {pipeline_mode = #tpu.pipeline_mode<synchronous>, transform_indices = @transform_3, window_bounds = array<i64: 64, 128>}, {pipeline_mode = #tpu.pipeline_mode<synchronous>, transform_indices = @transform_4, window_bounds = array<i64: 64, 1>}, {pipeline_mode = #tpu.pipeline_mode<synchronous>, transform_indices = @transform_5, window_bounds = array<i64: 32, 64>}, {pipeline_mode = #tpu.pipeline_mode<synchronous>, transform_indices = @transform_6, window_bounds = array<i64: 32, 1>}, {pipeline_mode = #tpu.pipeline_mode<synchronous>, transform_indices = @transform_7, window_bounds = array<i64: 32, 1>}, {transform_indices = @transform_8, window_bounds = array<i64: 1>}, {transform_indices = @transform_9, window_bounds = array<i64: 1, 128>}]} {
    %c0 = arith.constant 0 : index
    %c0_0 = arith.constant 0 : index
    %0 = vector.load %arg2[%c0, %c0_0] : memref<128x32xbf16, #tpu.memory_space<vmem>>, vector<128x32xbf16>
    %c0_1 = arith.constant 0 : index
    %c0_2 = arith.constant 0 : index
    %1 = vector.load %arg1[%c0_1, %c0_2] : memref<32x128xbf16, #tpu.memory_space<vmem>>, vector<32x128xbf16>
    %cst = arith.constant dense<0.000000e+00> : vector<128x128xf32>
    %2 = tpu.matmul %0, %1, %cst {dimension_numbers = #tpu.dot_dimension_numbers<[1], [0], [0], [1], [0, 0, 1, 1], [], []>} : vector<128x32xbf16>, vector<32x128xbf16>, vector<128x128xf32> -> vector<128x128xf32>
    %c0_3 = arith.constant 0 : index
    %c0_4 = arith.constant 0 : index
    %3 = vector.load %arg3[%c0_3, %c0_4] : memref<128x1xf32, #tpu.memory_space<vmem>>, vector<128x1xf32>
    %4 = vector.broadcast %3 : vector<128x1xf32> to vector<128x128xf32>
    %5 = arith.addf %2, %4 : vector<128x128xf32>
    %cst_5 = arith.constant 0.000000e+00 : f32
    %6 = vector.broadcast %cst_5 : f32 to vector<128x128xf32>
    %7 = arith.maximumf %5, %6 : vector<128x128xf32>
    %8 = arith.truncf %7 : vector<128x128xf32> to vector<128x128xbf16>
    %c0_6 = arith.constant 0 : index
    %c0_7 = arith.constant 0 : index
    %9 = vector.load %arg4[%c0_6, %c0_7] : memref<64x128xbf16, #tpu.memory_space<vmem>>, vector<64x128xbf16>
    %cst_8 = arith.constant dense<0.000000e+00> : vector<64x128xf32>
    %10 = tpu.matmul %9, %8, %cst_8 {dimension_numbers = #tpu.dot_dimension_numbers<[1], [0], [0], [1], [0, 0, 1, 1], [], []>} : vector<64x128xbf16>, vector<128x128xbf16>, vector<64x128xf32> -> vector<64x128xf32>
    %c0_9 = arith.constant 0 : index
    %c0_10 = arith.constant 0 : index
    %11 = vector.load %arg5[%c0_9, %c0_10] : memref<64x1xf32, #tpu.memory_space<vmem>>, vector<64x1xf32>
    %12 = vector.broadcast %11 : vector<64x1xf32> to vector<64x128xf32>
    %13 = arith.addf %10, %12 : vector<64x128xf32>
    %cst_11 = arith.constant 0.000000e+00 : f32
    %14 = vector.broadcast %cst_11 : f32 to vector<64x128xf32>
    %15 = arith.maximumf %13, %14 : vector<64x128xf32>
    %16 = arith.truncf %15 : vector<64x128xf32> to vector<64x128xbf16>
    %c0_12 = arith.constant 0 : index
    %c0_13 = arith.constant 0 : index
    %17 = vector.load %arg6[%c0_12, %c0_13] : memref<32x64xbf16, #tpu.memory_space<vmem>>, vector<32x64xbf16>
    %cst_14 = arith.constant dense<0.000000e+00> : vector<32x128xf32>
    %18 = tpu.matmul %17, %16, %cst_14 {dimension_numbers = #tpu.dot_dimension_numbers<[1], [0], [0], [1], [0, 0, 1, 1], [], []>} : vector<32x64xbf16>, vector<64x128xbf16>, vector<32x128xf32> -> vector<32x128xf32>
    %c0_15 = arith.constant 0 : index
    %c0_16 = arith.constant 0 : index
    %19 = vector.load %arg7[%c0_15, %c0_16] : memref<32x1xf32, #tpu.memory_space<vmem>>, vector<32x1xf32>
    %20 = vector.broadcast %19 : vector<32x1xf32> to vector<32x128xf32>
    %21 = arith.addf %18, %20 : vector<32x128xf32>
    %cst_17 = arith.constant 0.000000e+00 : f32
    %22 = vector.broadcast %cst_17 : f32 to vector<32x128xf32>
    %23 = arith.maximumf %21, %22 : vector<32x128xf32>
    %c0_18 = arith.constant 0 : index
    %c0_19 = arith.constant 0 : index
    %24 = vector.load %arg8[%c0_18, %c0_19] : memref<32x1xf32, #tpu.memory_space<vmem>>, vector<32x1xf32>
    %25 = vector.broadcast %24 : vector<32x1xf32> to vector<32x128xf32>
    %26 = arith.mulf %23, %25 : vector<32x128xf32>
    %cst_20 = arith.constant dense<0.000000e+00> : vector<128xf32>
    %27 = vector.multi_reduction <add>, %26, %cst_20 [0] : vector<32x128xf32> to vector<128xf32>
    %28 = vector.shape_cast %27 : vector<128xf32> to vector<1x128xf32>
    %c0_21 = arith.constant 0 : index
    %29 = memref.load %arg9[%c0_21] : memref<1xf32, #tpu.memory_space<smem>>
    %30 = vector.broadcast %29 : f32 to vector<1x128xf32>
    %31 = arith.addf %28, %30 : vector<1x128xf32>
    %32 = arith.negf %31 : vector<1x128xf32>
    %33 = math.exp %32 : vector<1x128xf32>
    %cst_22 = arith.constant 1.000000e+00 : f32
    %34 = vector.broadcast %cst_22 : f32 to vector<1x128xf32>
    %35 = arith.addf %34, %33 : vector<1x128xf32>
    %36 = arith.divf %34, %35 : vector<1x128xf32>
    %c0_23 = arith.constant 0 : index
    %c0_24 = arith.constant 0 : index
    %37 = vector.load %arg10[%c0_23, %c0_24] : memref<1x128xf32, #tpu.memory_space<vmem>>, vector<1x128xf32>
    tpu.vector_store %arg10[%c0_23, %c0_24], %36 {strides = array<i32>} : memref<1x128xf32, #tpu.memory_space<vmem>>, vector<1x128xf32>,
    return
  }
  func.func @transform_0(%arg0: i32) -> (i32, i32) {
    %c0_i32 = arith.constant 0 : i32
    %c0_i32_0 = arith.constant 0 : i32
    return %c0_i32, %arg0 : i32, i32
  }
  func.func @transform_1(%arg0: i32) -> (i32, i32) {
    %c0_i32 = arith.constant 0 : i32
    %c0_i32_0 = arith.constant 0 : i32
    %c0_i32_1 = arith.constant 0 : i32
    return %c0_i32, %c0_i32_0 : i32, i32
  }
  func.func @transform_2(%arg0: i32) -> (i32, i32) {
    %c0_i32 = arith.constant 0 : i32
    %c0_i32_0 = arith.constant 0 : i32
    %c0_i32_1 = arith.constant 0 : i32
    return %c0_i32, %c0_i32_0 : i32, i32
  }
  func.func @transform_3(%arg0: i32) -> (i32, i32) {
    %c0_i32 = arith.constant 0 : i32
    %c0_i32_0 = arith.constant 0 : i32
    %c0_i32_1 = arith.constant 0 : i32
    return %c0_i32, %c0_i32_0 : i32, i32
  }
  func.func @transform_4(%arg0: i32) -> (i32, i32) {
    %c0_i32 = arith.constant 0 : i32
    %c0_i32_0 = arith.constant 0 : i32
    %c0_i32_1 = arith.constant 0 : i32
    return %c0_i32, %c0_i32_0 : i32, i32
  }
  func.func @transform_5(%arg0: i32) -> (i32, i32) {
    %c0_i32 = arith.constant 0 : i32
    %c0_i32_0 = arith.constant 0 : i32
    %c0_i32_1 = arith.constant 0 : i32
    return %c0_i32, %c0_i32_0 : i32, i32
  }
  func.func @transform_6(%arg0: i32) -> (i32, i32) {
    %c0_i32 = arith.constant 0 : i32
    %c0_i32_0 = arith.constant 0 : i32
    %c0_i32_1 = arith.constant 0 : i32
    return %c0_i32, %c0_i32_0 : i32, i32
  }
  func.func @transform_7(%arg0: i32) -> (i32, i32) {
    %c0_i32 = arith.constant 0 : i32
    %c0_i32_0 = arith.constant 0 : i32
    %c0_i32_1 = arith.constant 0 : i32
    return %c0_i32, %c0_i32_0 : i32, i32
  }
  func.func @transform_8(%arg0: i32) -> i32 {
    %c0_i32 = arith.constant 0 : i32
    %c0_i32_0 = arith.constant 0 : i32
    return %c0_i32 : i32
  }
  func.func @transform_9(%arg0: i32) -> (i32, i32) {
    %c0_i32 = arith.constant 0 : i32
    %c0_i32_0 = arith.constant 0 : i32
    return %c0_i32, %arg0 : i32, i32
  }
}

</mosaic_0001>

<llo_original>
// kernel: tpu_custom_call.1
$region0: #{tpu_custom_call.1}
  #allocation0 [shape = 'u32[]', space=smem, size = 0x4, offset = 0x4, fixed_abs, tag = 'smem constant byte address 0x4 - core index']
  #allocation1 [shape = 'u32[144,128]{1,0:T(1,128)}', space=vmem, size = 0x12000, scoped, tag = 'internal scratch']
  #allocation2 [shape = 'f32[1]{0:T(128)S(6)}', space=smem, size = 0x200, scoped, tag = 'scoped memory for tpu_custom_call.1']
  %s0 = inlined_call_operand.vmem [shape: bf16[32,128], index: 0, kind: input, shape index: {}]
  %s1 = inlined_call_operand.vmem [shape: bf16[128,32], index: 1, kind: input, shape index: {}]
  %s2 = inlined_call_operand.vmem [shape: f32[128,1], index: 2, kind: input, shape index: {}]
  %s3 = inlined_call_operand.vmem [shape: bf16[64,128], index: 3, kind: input, shape index: {}]
  %s4 = inlined_call_operand.vmem [shape: f32[64,1], index: 4, kind: input, shape index: {}]
  %s5 = inlined_call_operand.vmem [shape: bf16[32,64], index: 5, kind: input, shape index: {}]
  %s6 = inlined_call_operand.vmem [shape: f32[32,1], index: 6, kind: input, shape index: {}]
  %s7 = inlined_call_operand.vmem [shape: f32[32,1], index: 7, kind: input, shape index: {}]
  %s8 = inlined_call_operand.<no memory space> [shape: f32[1], index: 8, kind: input, shape index: {}]
  %s9 = inlined_call_operand.hbm [shape: f32[1,128], index: 9, kind: output, shape index: {}]
  %s10 = sld [smem:[#allocation0]]
  $region46: #{tpu_custom_call.1} parent=0
    _
  %s12 = ssub.s32 1, %s10
  %s13 = scalar_select 0, %s12, %s10
  %14 = sst [smem:[#allocation2]] %s8
  $region1: #{tpu_custom_call.1} parent=0
    #allocation3 [shape = 'u8[512]{0}', space=vmem, size = 0x400, scoped, tag = 'output window, operand 0, single buffered']
    #allocation4 [shape = 's32[1]{0}', space=sflag, size = 0x4, scoped, tag = 'scoped memory for tpu_custom_call.1']
    %15 = vsyncpa [#allocation4], 0
    // Predicated region
    $region2: #{tpu_custom_call.1} parent=1 // pred_check
      _
    $region3: #{tpu_custom_call.1} parent=1 // pred_check_branch
      %17 = sbr.rel (0) target = $region5
    $region4: #{tpu_custom_call.1} parent=1 // pred_region
      _
    $region5: #{tpu_custom_call.1} parent=1 // pred_fallthru
      _
    // Predicated region
    $region6: #{tpu_custom_call.1} parent=1 // pred_check
      _
    $region7: #{tpu_custom_call.1} parent=1 // pred_check_branch
      %19 = sbr.rel (0) target = $region9
    $region8: #{tpu_custom_call.1} parent=1 // pred_region
      _
    $region9: #{tpu_custom_call.1} parent=1 // pred_fallthru
      _
    // Predicated region
    $region10: #{tpu_custom_call.1} parent=1 // pred_check
      _
    $region11: #{tpu_custom_call.1} parent=1 // pred_check_branch
      %21 = sbr.rel (0) target = $region13
    $region12: #{tpu_custom_call.1} parent=1 // pred_region
      _
    $region13: #{tpu_custom_call.1} parent=1 // pred_fallthru
      _
    // Predicated region
    $region14: #{tpu_custom_call.1} parent=1 // pred_check
      _
    $region15: #{tpu_custom_call.1} parent=1 // pred_check_branch
      %23 = sbr.rel (0) target = $region17
    $region16: #{tpu_custom_call.1} parent=1 // pred_region
      _
    $region17: #{tpu_custom_call.1} parent=1 // pred_fallthru
      _
    // Predicated region
    $region18: #{tpu_custom_call.1} parent=1 // pred_check
      _
    $region19: #{tpu_custom_call.1} parent=1 // pred_check_branch
      %25 = sbr.rel (0) target = $region21
    $region20: #{tpu_custom_call.1} parent=1 // pred_region
      _
    $region21: #{tpu_custom_call.1} parent=1 // pred_fallthru
      _
    // Predicated region
    $region22: #{tpu_custom_call.1} parent=1 // pred_check
      _
    $region23: #{tpu_custom_call.1} parent=1 // pred_check_branch
      %27 = sbr.rel (0) target = $region25
    $region24: #{tpu_custom_call.1} parent=1 // pred_region
      _
    $region25: #{tpu_custom_call.1} parent=1 // pred_fallthru
      _
    // Predicated region
    $region26: #{tpu_custom_call.1} parent=1 // pred_check
      _
    $region27: #{tpu_custom_call.1} parent=1 // pred_check_branch
      %29 = sbr.rel (0) target = $region29
    $region28: #{tpu_custom_call.1} parent=1 // pred_region
      _
    $region29: #{tpu_custom_call.1} parent=1 // pred_fallthru
      _
    // Predicated region
    $region30: #{tpu_custom_call.1} parent=1 // pred_check
      _
    $region31: #{tpu_custom_call.1} parent=1 // pred_check_branch
      %31 = sbr.rel (0) target = $region33
    $region32: #{tpu_custom_call.1} parent=1 // pred_region
      _
    $region33: #{tpu_custom_call.1} parent=1 // pred_fallthru
      _
    // Predicated region
    $region34: #{tpu_custom_call.1} parent=1 // pred_check
      _
    $region35: #{tpu_custom_call.1} parent=1 // pred_check_branch
      %33 = sbr.rel (0) target = $region37
    $region36: #{tpu_custom_call.1} parent=1 // pred_region
      _
    $region37: #{tpu_custom_call.1} parent=1 // pred_fallthru
      _
    %v35 = vld [vmem:[%s1] sm:$0xf]
    %v36 = vld [vmem:[%s1 + $0x4] sm:$0xf]
    %v37 = vld [vmem:[%s1 + $0x8] sm:$0xf]
    %v38 = vld [vmem:[%s1 + $0xc] sm:$0xf]
    %v39 = vld [vmem:[%s1 + $0x10] sm:$0xf]
    %v40 = vld [vmem:[%s1 + $0x14] sm:$0xf]
    %v41 = vld [vmem:[%s1 + $0x18] sm:$0xf]
    %v42 = vld [vmem:[%s1 + $0x1c] sm:$0xf]
    %v43 = vld [vmem:[%s1 + $0x20] sm:$0xf]
    %v44 = vld [vmem:[%s1 + $0x24] sm:$0xf]
    %v45 = vld [vmem:[%s1 + $0x28] sm:$0xf]
    %v46 = vld [vmem:[%s1 + $0x2c] sm:$0xf]
    %v47 = vld [vmem:[%s1 + $0x30] sm:$0xf]
    %v48 = vld [vmem:[%s1 + $0x34] sm:$0xf]
    %v49 = vld [vmem:[%s1 + $0x38] sm:$0xf]
    %v50 = vld [vmem:[%s1 + $0x3c] sm:$0xf]
    %v51 = vld [vmem:[%s0] sm:$0xf]
    %v52 = vld [vmem:[%s0 + $0x4] sm:$0xf]
    %v53 = vld [vmem:[%s0 + $0x8] sm:$0xf]
    %v54 = vld [vmem:[%s0 + $0xc] sm:$0xf]
    %v55 = vld [vmem:[%s2] sm:$0xff]
    %v56 = vld [vmem:[%s2 + $0x8] sm:$0xff]
    %v57 = vld [vmem:[%s2 + $0x10] sm:$0xff]
    %v58 = vld [vmem:[%s2 + $0x18] sm:$0xff]
    %v59 = vld [vmem:[%s2 + $0x20] sm:$0xff]
    %v60 = vld [vmem:[%s2 + $0x28] sm:$0xff]
    %v61 = vld [vmem:[%s2 + $0x30] sm:$0xff]
    %v62 = vld [vmem:[%s2 + $0x38] sm:$0xff]
    %v63 = vld [vmem:[%s2 + $0x40] sm:$0xff]
    %v64 = vld [vmem:[%s2 + $0x48] sm:$0xff]
    %v65 = vld [vmem:[%s2 + $0x50] sm:$0xff]
    %v66 = vld [vmem:[%s2 + $0x58] sm:$0xff]
    %v67 = vld [vmem:[%s2 + $0x60] sm:$0xff]
    %v68 = vld [vmem:[%s2 + $0x68] sm:$0xff]
    %v69 = vld [vmem:[%s2 + $0x70] sm:$0xff]
    %v70 = vld [vmem:[%s2 + $0x78] sm:$0xff]
    %72 = vset.pattern.permute.xlu0 0
    %73 = vperm.xlu0 %72, %v55
    %v74 = vpop.permute.xlu0 %73
    %77 = vset.pattern.permute.xlu0 0
    %78 = vperm.xlu0 %77, %v56
    %v79 = vpop.permute.xlu0 %78
    %82 = vset.pattern.permute.xlu0 0
    %83 = vperm.xlu0 %82, %v57
    %v84 = vpop.permute.xlu0 %83
    %87 = vset.pattern.permute.xlu0 0
    %88 = vperm.xlu0 %87, %v58
    %v89 = vpop.permute.xlu0 %88
    %92 = vset.pattern.permute.xlu0 0
    %93 = vperm.xlu0 %92, %v59
    %v94 = vpop.permute.xlu0 %93
    %97 = vset.pattern.permute.xlu0 0
    %98 = vperm.xlu0 %97, %v60
    %v99 = vpop.permute.xlu0 %98
    %102 = vset.pattern.permute.xlu0 0
    %103 = vperm.xlu0 %102, %v61
    %v104 = vpop.permute.xlu0 %103
    %107 = vset.pattern.permute.xlu0 0
    %108 = vperm.xlu0 %107, %v62
    %v109 = vpop.permute.xlu0 %108
    %112 = vset.pattern.permute.xlu0 0
    %113 = vperm.xlu0 %112, %v63
    %v114 = vpop.permute.xlu0 %113
    %117 = vset.pattern.permute.xlu0 0
    %118 = vperm.xlu0 %117, %v64
    %v119 = vpop.permute.xlu0 %118
    %122 = vset.pattern.permute.xlu0 0
    %123 = vperm.xlu0 %122, %v65
    %v124 = vpop.permute.xlu0 %123
    %127 = vset.pattern.permute.xlu0 0
    %128 = vperm.xlu0 %127, %v66
    %v129 = vpop.permute.xlu0 %128
    %132 = vset.pattern.permute.xlu0 0
    %133 = vperm.xlu0 %132, %v67
    %v134 = vpop.permute.xlu0 %133
    %137 = vset.pattern.permute.xlu0 0
    %138 = vperm.xlu0 %137, %v68
    %v139 = vpop.permute.xlu0 %138
    %142 = vset.pattern.permute.xlu0 0
    %143 = vperm.xlu0 %142, %v69
    %v144 = vpop.permute.xlu0 %143
    %147 = vset.pattern.permute.xlu0 0
    %148 = vperm.xlu0 %147, %v70
    %v149 = vpop.permute.xlu0 %148
    %v167 = vunpack.c.l.b16 %v35
    %v168 = vunpack.c.l.b16 %v36
    %v169 = vunpack.c.l.b16 %v37
    %v170 = vunpack.c.l.b16 %v38
    %v171 = vunpack.c.l.b16 %v39
    %v172 = vunpack.c.l.b16 %v40
    %v173 = vunpack.c.l.b16 %v41
    %v174 = vunpack.c.l.b16 %v42
    %v175 = vunpack.c.l.b16 %v43
    %v176 = vunpack.c.l.b16 %v44
    %v177 = vunpack.c.l.b16 %v45
    %v178 = vunpack.c.l.b16 %v46
    %v179 = vunpack.c.l.b16 %v47
    %v180 = vunpack.c.l.b16 %v48
    %v181 = vunpack.c.l.b16 %v49
    %v182 = vunpack.c.l.b16 %v50
    %v183 = vpack.c.b16 %v168, %v167
    %v184 = vpack.c.b16 %v170, %v169
    %v185 = vpack.c.b16 %v172, %v171
    %v186 = vpack.c.b16 %v174, %v173
    %v187 = vpack.c.b16 %v176, %v175
    %v188 = vpack.c.b16 %v178, %v177
    %v189 = vpack.c.b16 %v180, %v179
    %v190 = vpack.c.b16 %v182, %v181
    %v195 = vunpack.c.l.b16 %v51
    %v196 = vunpack.c.l.b16 %v52
    %v197 = vunpack.c.l.b16 %v53
    %v198 = vunpack.c.l.b16 %v54
    %v199 = vpack.c.b16 %v196, %v195
    %v200 = vpack.c.b16 %v198, %v197
    %vm203 = vcmask 261120
    %v205 = vsel %vm203, %v183, 0
    %v208 = vsel %vm203, %v184, 0
    %v211 = vsel %vm203, %v185, 0
    %v214 = vsel %vm203, %v186, 0
    %v217 = vsel %vm203, %v187, 0
    %v220 = vsel %vm203, %v188, 0
    %v223 = vsel %vm203, %v189, 0
    %v226 = vsel %vm203, %v190, 0
    %228 = vmatprep.subr.bf16.mxu0 0
    %229 = vmatpush1.bf16.msra.mxu0 %v199
    %230 = vmatprep.subr.bf16.mxu0 0
    %231 = vmatpush1.bf16.msra.mxu0 %v200
    %232 = vmatprep.subr.bf16.mxu0 0
    %233 = vmatpush1.bf16.msra.mxu0 0
    %234 = vmatprep.subr.bf16.mxu0 0
    %235 = vmatpush1.bf16.msra.mxu0 0
    %236 = vmatprep.subr.bf16.mxu0 0
    %237 = vmatpush1.bf16.msra.mxu0 0
    %238 = vmatprep.subr.bf16.mxu0 0
    %239 = vmatpush1.bf16.msra.mxu0 0
    %240 = vmatprep.subr.bf16.mxu0 0
    %241 = vmatpush1.bf16.msra.mxu0 0
    %242 = vmatprep.subr.bf16.mxu0 0
    %243 = vmatpush1.bf16.msra.mxu0 0
    %244 = vmatprep.subr.bf16.mxu0 0
    %245 = vmatpush1.bf16.msra.mxu0 0
    %246 = vmatprep.subr.bf16.mxu0 0
    %247 = vmatpush1.bf16.msra.mxu0 0
    %248 = vmatprep.subr.bf16.mxu0 0
    %249 = vmatpush1.bf16.msra.mxu0 0
    %250 = vmatprep.subr.bf16.mxu0 0
    %251 = vmatpush1.bf16.msra.mxu0 0
    %252 = vmatprep.subr.bf16.mxu0 0
    %253 = vmatpush1.bf16.msra.mxu0 0
    %254 = vmatprep.subr.bf16.mxu0 0
    %255 = vmatpush1.bf16.msra.mxu0 0
    %256 = vmatprep.subr.bf16.mxu0 0
    %257 = vmatpush1.bf16.msra.mxu0 0
    %258 = vmatprep.subr.bf16.mxu0 0
    %259 = vmatpush1.bf16.msra.mxu0 0
    %260 = vmatprep.mubr.bf16.mxu0 0
    %261 = vmatmul.mubr.bf16.gmra.mrb[0].mxu0 %v205
    %v262 = vpop.f32.mrb[0].mxu0
    %v263 = vadd.f32 %v74, %v262
    %v264 = vpop.f32.mrb[0].mxu0
    %v265 = vpop.f32.mrb[0].mxu0
    %v266 = vadd.f32 %v79, %v265
    %v267 = vpop.f32.mrb[0].mxu0
    %268 = vmatprep.mubr.bf16.mxu0 0
    %269 = vmatmul.mubr.bf16.gmra.mrb[0].mxu0 %v208
    %v270 = vpop.f32.mrb[0].mxu0
    %v271 = vadd.f32 %v84, %v270
    %v272 = vpop.f32.mrb[0].mxu0
    %v273 = vpop.f32.mrb[0].mxu0
    %v274 = vadd.f32 %v89, %v273
    %v275 = vpop.f32.mrb[0].mxu0
    %276 = vmatprep.mubr.bf16.mxu0 0
    %277 = vmatmul.mubr.bf16.gmra.mrb[0].mxu0 %v211
    %v278 = vpop.f32.mrb[0].mxu0
    %v279 = vadd.f32 %v94, %v278
    %v280 = vpop.f32.mrb[0].mxu0
    %v281 = vpop.f32.mrb[0].mxu0
    %v282 = vadd.f32 %v99, %v281
    %v283 = vpop.f32.mrb[0].mxu0
    %284 = vmatprep.mubr.bf16.mxu0 0
    %285 = vmatmul.mubr.bf16.gmra.mrb[0].mxu0 %v214
    %v286 = vpop.f32.mrb[0].mxu0
    %v287 = vadd.f32 %v104, %v286
    %v288 = vpop.f32.mrb[0].mxu0
    %v289 = vpop.f32.mrb[0].mxu0
    %v290 = vadd.f32 %v109, %v289
    %v291 = vpop.f32.mrb[0].mxu0
    %292 = vmatprep.mubr.bf16.mxu0 0
    %293 = vmatmul.mubr.bf16.gmra.mrb[0].mxu0 %v217
    %v294 = vpop.f32.mrb[0].mxu0
    %v295 = vadd.f32 %v114, %v294
    %v296 = vpop.f32.mrb[0].mxu0
    %v297 = vpop.f32.mrb[0].mxu0
    %v298 = vadd.f32 %v119, %v297
    %v299 = vpop.f32.mrb[0].mxu0
    %300 = vmatprep.mubr.bf16.mxu0 0
    %301 = vmatmul.mubr.bf16.gmra.mrb[0].mxu0 %v220
    %v302 = vpop.f32.mrb[0].mxu0
    %v303 = vadd.f32 %v124, %v302
    %v304 = vpop.f32.mrb[0].mxu0
    %v305 = vpop.f32.mrb[0].mxu0
    %v306 = vadd.f32 %v129, %v305
    %v307 = vpop.f32.mrb[0].mxu0
    %308 = vmatprep.mubr.bf16.mxu0 0
    %309 = vmatmul.mubr.bf16.gmra.mrb[0].mxu0 %v223
    %v310 = vpop.f32.mrb[0].mxu0
    %v311 = vadd.f32 %v134, %v310
    %v312 = vpop.f32.mrb[0].mxu0
    %v313 = vpop.f32.mrb[0].mxu0
    %v314 = vadd.f32 %v139, %v313
    %v315 = vpop.f32.mrb[0].mxu0
    %316 = vmatprep.mubr.bf16.mxu0 0
    %317 = vmatmul.mubr.bf16.gmra.mrb[0].mxu0 %v226
    %v318 = vpop.f32.mrb[0].mxu0
    %v319 = vadd.f32 %v144, %v318
    %v320 = vpop.f32.mrb[0].mxu0
    %v321 = vpop.f32.mrb[0].mxu0
    %v322 = vadd.f32 %v149, %v321
    %v323 = vpop.f32.mrb[0].mxu0
    %324 = vdwg.mxu0
    %v325 = vmax.f32 %v263, 0.0
    %v326 = vmax.f32 %v266, 0.0
    %v327 = vmax.f32 %v271, 0.0
    %v328 = vmax.f32 %v274, 0.0
    %v329 = vmax.f32 %v279, 0.0
    %v330 = vmax.f32 %v282, 0.0
    %v331 = vmax.f32 %v287, 0.0
    %v332 = vmax.f32 %v290, 0.0
    %v333 = vmax.f32 %v295, 0.0
    %v334 = vmax.f32 %v298, 0.0
    %v335 = vmax.f32 %v303, 0.0
    %v336 = vmax.f32 %v306, 0.0
    %v337 = vmax.f32 %v311, 0.0
    %v338 = vmax.f32 %v314, 0.0
    %v339 = vmax.f32 %v319, 0.0
    %v340 = vmax.f32 %v322, 0.0
    %v341 = vpack.c.bf16 %v326, %v325
    %v342 = vpack.c.bf16 %v328, %v327
    %v343 = vpack.c.bf16 %v330, %v329
    %v344 = vpack.c.bf16 %v332, %v331
    %v345 = vpack.c.bf16 %v334, %v333
    %v346 = vpack.c.bf16 %v336, %v335
    %v347 = vpack.c.bf16 %v338, %v337
    %v348 = vpack.c.bf16 %v340, %v339
    %v349 = vld [vmem:[%s3] sm:$0xf]
    %v350 = vld [vmem:[%s3 + $0x4] sm:$0xf]
    %v351 = vld [vmem:[%s3 + $0x8] sm:$0xf]
    %v352 = vld [vmem:[%s3 + $0xc] sm:$0xf]
    %v353 = vld [vmem:[%s3 + $0x10] sm:$0xf]
    %v354 = vld [vmem:[%s3 + $0x14] sm:$0xf]
    %v355 = vld [vmem:[%s3 + $0x18] sm:$0xf]
    %v356 = vld [vmem:[%s3 + $0x1c] sm:$0xf]
    %v357 = vld [vmem:[%s4] sm:$0xff]
    %v358 = vld [vmem:[%s4 + $0x8] sm:$0xff]
    %v359 = vld [vmem:[%s4 + $0x10] sm:$0xff]
    %v360 = vld [vmem:[%s4 + $0x18] sm:$0xff]
    %v361 = vld [vmem:[%s4 + $0x20] sm:$0xff]
    %v362 = vld [vmem:[%s4 + $0x28] sm:$0xff]
    %v363 = vld [vmem:[%s4 + $0x30] sm:$0xff]
    %v364 = vld [vmem:[%s4 + $0x38] sm:$0xff]
    %366 = vset.pattern.permute.xlu0 0
    %367 = vperm.xlu0 %366, %v357
    %v368 = vpop.permute.xlu0 %367
    %371 = vset.pattern.permute.xlu0 0
    %372 = vperm.xlu0 %371, %v358
    %v373 = vpop.permute.xlu0 %372
    %376 = vset.pattern.permute.xlu0 0
    %377 = vperm.xlu0 %376, %v359
    %v378 = vpop.permute.xlu0 %377
    %381 = vset.pattern.permute.xlu0 0
    %382 = vperm.xlu0 %381, %v360
    %v383 = vpop.permute.xlu0 %382
    %386 = vset.pattern.permute.xlu0 0
    %387 = vperm.xlu0 %386, %v361
    %v388 = vpop.permute.xlu0 %387
    %391 = vset.pattern.permute.xlu0 0
    %392 = vperm.xlu0 %391, %v362
    %v393 = vpop.permute.xlu0 %392
    %396 = vset.pattern.permute.xlu0 0
    %397 = vperm.xlu0 %396, %v363
    %v398 = vpop.permute.xlu0 %397
    %401 = vset.pattern.permute.xlu0 0
    %402 = vperm.xlu0 %401, %v364
    %v403 = vpop.permute.xlu0 %402
    %v413 = vunpack.c.l.b16 %v349
    %v414 = vunpack.c.l.b16 %v350
    %v415 = vunpack.c.l.b16 %v351
    %v416 = vunpack.c.l.b16 %v352
    %v417 = vunpack.c.l.b16 %v353
    %v418 = vunpack.c.l.b16 %v354
    %v419 = vunpack.c.l.b16 %v355
    %v420 = vunpack.c.l.b16 %v356
    %v421 = vpack.c.b16 %v414, %v413
    %v422 = vpack.c.b16 %v416, %v415
    %v423 = vpack.c.b16 %v418, %v417
    %v424 = vpack.c.b16 %v420, %v419
    %429 = vmatprep.subr.bf16.mxu0 0
    %430 = vmatpush1.bf16.msra.mxu0 %v341
    %431 = vmatprep.subr.bf16.mxu0 0
    %432 = vmatpush1.bf16.msra.mxu0 %v342
    %433 = vmatprep.subr.bf16.mxu0 0
    %434 = vmatpush1.bf16.msra.mxu0 %v343
    %435 = vmatprep.subr.bf16.mxu0 0
    %436 = vmatpush1.bf16.msra.mxu0 %v344
    %437 = vmatprep.subr.bf16.mxu0 0
    %438 = vmatpush1.bf16.msra.mxu0 %v345
    %439 = vmatprep.subr.bf16.mxu0 0
    %440 = vmatpush1.bf16.msra.mxu0 %v346
    %441 = vmatprep.subr.bf16.mxu0 0
    %442 = vmatpush1.bf16.msra.mxu0 %v347
    %443 = vmatprep.subr.bf16.mxu0 0
    %444 = vmatpush1.bf16.msra.mxu0 %v348
    %445 = vmatprep.subr.bf16.mxu0 0
    %446 = vmatpush1.bf16.msra.mxu0 0
    %447 = vmatprep.subr.bf16.mxu0 0
    %448 = vmatpush1.bf16.msra.mxu0 0
    %449 = vmatprep.subr.bf16.mxu0 0
    %450 = vmatpush1.bf16.msra.mxu0 0
    %451 = vmatprep.subr.bf16.mxu0 0
    %452 = vmatpush1.bf16.msra.mxu0 0
    %453 = vmatprep.subr.bf16.mxu0 0
    %454 = vmatpush1.bf16.msra.mxu0 0
    %455 = vmatprep.subr.bf16.mxu0 0
    %456 = vmatpush1.bf16.msra.mxu0 0
    %457 = vmatprep.subr.bf16.mxu0 0
    %458 = vmatpush1.bf16.msra.mxu0 0
    %459 = vmatprep.subr.bf16.mxu0 0
    %460 = vmatpush1.bf16.msra.mxu0 0
    %461 = vmatprep.mubr.bf16.mxu0 0
    %462 = vmatmul.mubr.bf16.gmra.mrb[0].mxu0 %v421
    %v463 = vpop.f32.mrb[0].mxu0
    %v464 = vadd.f32 %v368, %v463
    %v465 = vpop.f32.mrb[0].mxu0
    %v466 = vpop.f32.mrb[0].mxu0
    %v467 = vadd.f32 %v373, %v466
    %v468 = vpop.f32.mrb[0].mxu0
    %469 = vmatprep.mubr.bf16.mxu0 0
    %470 = vmatmul.mubr.bf16.gmra.mrb[0].mxu0 %v422
    %v471 = vpop.f32.mrb[0].mxu0
    %v472 = vadd.f32 %v378, %v471
    %v473 = vpop.f32.mrb[0].mxu0
    %v474 = vpop.f32.mrb[0].mxu0
    %v475 = vadd.f32 %v383, %v474
    %v476 = vpop.f32.mrb[0].mxu0
    %477 = vmatprep.mubr.bf16.mxu0 0
    %478 = vmatmul.mubr.bf16.gmra.mrb[0].mxu0 %v423
    %v479 = vpop.f32.mrb[0].mxu0
    %v480 = vadd.f32 %v388, %v479
    %v481 = vpop.f32.mrb[0].mxu0
    %v482 = vpop.f32.mrb[0].mxu0
    %v483 = vadd.f32 %v393, %v482
    %v484 = vpop.f32.mrb[0].mxu0
    %485 = vmatprep.mubr.bf16.mxu0 0
    %486 = vmatmul.mubr.bf16.gmra.mrb[0].mxu0 %v424
    %v487 = vpop.f32.mrb[0].mxu0
    %v488 = vadd.f32 %v398, %v487
    %v489 = vpop.f32.mrb[0].mxu0
    %v490 = vpop.f32.mrb[0].mxu0
    %v491 = vadd.f32 %v403, %v490
    %v492 = vpop.f32.mrb[0].mxu0
    %493 = vdwg.mxu0
    %v494 = vmax.f32 %v464, 0.0
    %v495 = vmax.f32 %v467, 0.0
    %v496 = vmax.f32 %v472, 0.0
    %v497 = vmax.f32 %v475, 0.0
    %v498 = vmax.f32 %v480, 0.0
    %v499 = vmax.f32 %v483, 0.0
    %v500 = vmax.f32 %v488, 0.0
    %v501 = vmax.f32 %v491, 0.0
    %v502 = vpack.c.bf16 %v495, %v494
    %v503 = vpack.c.bf16 %v497, %v496
    %v504 = vpack.c.bf16 %v499, %v498
    %v505 = vpack.c.bf16 %v501, %v500
    %v506 = vld [vmem:[%s5] sm:$0xf]
    %v507 = vld [vmem:[%s5 + $0x4] sm:$0xf]
    %v508 = vld [vmem:[%s5 + $0x8] sm:$0xf]
    %v509 = vld [vmem:[%s5 + $0xc] sm:$0xf]
    %v510 = vld [vmem:[%s6] sm:$0xff]
    %v511 = vld [vmem:[%s6 + $0x8] sm:$0xff]
    %v512 = vld [vmem:[%s6 + $0x10] sm:$0xff]
    %v513 = vld [vmem:[%s6 + $0x18] sm:$0xff]
    %515 = vset.pattern.permute.xlu0 0
    %516 = vperm.xlu0 %515, %v510
    %v517 = vpop.permute.xlu0 %516
    %520 = vset.pattern.permute.xlu0 0
    %521 = vperm.xlu0 %520, %v511
    %v522 = vpop.permute.xlu0 %521
    %525 = vset.pattern.permute.xlu0 0
    %526 = vperm.xlu0 %525, %v512
    %v527 = vpop.permute.xlu0 %526
    %530 = vset.pattern.permute.xlu0 0
    %531 = vperm.xlu0 %530, %v513
    %v532 = vpop.permute.xlu0 %531
    %v538 = vunpack.c.l.b16 %v506
    %v539 = vunpack.c.l.b16 %v507
    %v540 = vunpack.c.l.b16 %v508
    %v541 = vunpack.c.l.b16 %v509
    %v542 = vpack.c.b16 %v539, %v538
    %v543 = vpack.c.b16 %v541, %v540
    %vm544 = vcmask 523264
    %v546 = vsel %vm544, %v542, 0
    %v549 = vsel %vm544, %v543, 0
    %551 = vmatprep.subr.bf16.mxu0 0
    %552 = vmatpush1.bf16.msra.mxu0 %v502
    %553 = vmatprep.subr.bf16.mxu0 0
    %554 = vmatpush1.bf16.msra.mxu0 %v503
    %555 = vmatprep.subr.bf16.mxu0 0
    %556 = vmatpush1.bf16.msra.mxu0 %v504
    %557 = vmatprep.subr.bf16.mxu0 0
    %558 = vmatpush1.bf16.msra.mxu0 %v505
    %559 = vmatprep.subr.bf16.mxu0 0
    %560 = vmatpush1.bf16.msra.mxu0 0
    %561 = vmatprep.subr.bf16.mxu0 0
    %562 = vmatpush1.bf16.msra.mxu0 0
    %563 = vmatprep.subr.bf16.mxu0 0
    %564 = vmatpush1.bf16.msra.mxu0 0
    %565 = vmatprep.subr.bf16.mxu0 0
    %566 = vmatpush1.bf16.msra.mxu0 0
    %567 = vmatprep.subr.bf16.mxu0 0
    %568 = vmatpush1.bf16.msra.mxu0 0
    %569 = vmatprep.subr.bf16.mxu0 0
    %570 = vmatpush1.bf16.msra.mxu0 0
    %571 = vmatprep.subr.bf16.mxu0 0
    %572 = vmatpush1.bf16.msra.mxu0 0
    %573 = vmatprep.subr.bf16.mxu0 0
    %574 = vmatpush1.bf16.msra.mxu0 0
    %575 = vmatprep.subr.bf16.mxu0 0
    %576 = vmatpush1.bf16.msra.mxu0 0
    %577 = vmatprep.subr.bf16.mxu0 0
    %578 = vmatpush1.bf16.msra.mxu0 0
    %579 = vmatprep.subr.bf16.mxu0 0
    %580 = vmatpush1.bf16.msra.mxu0 0
    %581 = vmatprep.subr.bf16.mxu0 0
    %582 = vmatpush1.bf16.msra.mxu0 0
    %583 = vmatprep.mubr.bf16.mxu0 0
    %584 = vmatmul.mubr.bf16.gmra.mrb[0].mxu0 %v546
    %v585 = vpop.f32.mrb[0].mxu0
    %v586 = vadd.f32 %v517, %v585
    %v587 = vpop.f32.mrb[0].mxu0
    %v588 = vpop.f32.mrb[0].mxu0
    %v589 = vadd.f32 %v522, %v588
    %v590 = vpop.f32.mrb[0].mxu0
    %591 = vmatprep.mubr.bf16.mxu0 0
    %592 = vmatmul.mubr.bf16.gmra.mrb[0].mxu0 %v549
    %v593 = vpop.f32.mrb[0].mxu0
    %v594 = vadd.f32 %v527, %v593
    %v595 = vpop.f32.mrb[0].mxu0
    %v596 = vpop.f32.mrb[0].mxu0
    %v597 = vadd.f32 %v532, %v596
    %v598 = vpop.f32.mrb[0].mxu0
    %599 = vdwg.mxu0
    %v600 = vmax.f32 %v586, 0.0
    %v601 = vmax.f32 %v589, 0.0
    %v602 = vmax.f32 %v594, 0.0
    %v603 = vmax.f32 %v597, 0.0
    %v604 = vld [vmem:[%s7] sm:$0xff]
    %v605 = vld [vmem:[%s7 + $0x8] sm:$0xff]
    %v606 = vld [vmem:[%s7 + $0x10] sm:$0xff]
    %v607 = vld [vmem:[%s7 + $0x18] sm:$0xff]
    %609 = vset.pattern.permute.xlu0 0
    %610 = vperm.xlu0 %609, %v604
    %v611 = vpop.permute.xlu0 %610
    %614 = vset.pattern.permute.xlu0 0
    %615 = vperm.xlu0 %614, %v605
    %v616 = vpop.permute.xlu0 %615
    %619 = vset.pattern.permute.xlu0 0
    %620 = vperm.xlu0 %619, %v606
    %v621 = vpop.permute.xlu0 %620
    %624 = vset.pattern.permute.xlu0 0
    %625 = vperm.xlu0 %624, %v607
    %v626 = vpop.permute.xlu0 %625
    %v628 = vmul.f32 %v600, %v611
    %v629 = vmul.f32 %v601, %v616
    %v630 = vmul.f32 %v602, %v621
    %v631 = vmul.f32 %v603, %v626
    %v632 = vadd.f32 %v628, %v629
    %v633 = vadd.f32 %v632, %v630
    %v634 = vadd.f32 %v633, %v631
    %v635 = vrot.slane %v634, 4
    %v636 = vadd.f32 %v634, %v635
    %v637 = vrot.slane %v636, 2
    %v638 = vadd.f32 %v636, %v637
    %v639 = vrot.slane %v638, 1
    %v640 = vadd.f32 %v638, %v639
    %s641 = sld [smem:[#allocation2]]
    %v642 = vstv %s641
    %v643 = vadd.f32 %v640, %v642
    %v644 = vxor.u32 %v643, 2147483648
    %v645 = vmul.f32 %v644, 1.442695
    %v646 = vpow.pop %v645
    %v647 = vadd.f32 %v646, 1.0
    %v648 = vrcp.pop %v647
    %v649 = vmul.f32 1.0, %v648
    %650 = vst [vmem:[#allocation3] sm:$0x1] %v649
    // Predicated region
    $region38: #{tpu_custom_call.1} parent=1 // pred_check
      _
    $region39: #{tpu_custom_call.1} parent=1 // pred_check_branch
      %652 = sbr.rel (0) target = $region41
    $region40: #{tpu_custom_call.1} parent=1 // pred_region
      %s654 = ssub.s32 16, 16
      %655 = vsyncadd [#allocation4], %s654
      %s657 = sshll.u32 [#allocation3], 4
      %s658 = int_to_ptr.vmem [resolvable:$true] %s657
      %660 = dma.vmem_to_hbm [thread:$0]  %s658, 16, %s9, [#allocation4]
    $region41: #{tpu_custom_call.1} parent=1 // pred_fallthru
      _
    // Predicated region
    $region42: #{tpu_custom_call.1} parent=1 // pred_check
      _
    $region43: #{tpu_custom_call.1} parent=1 // pred_check_branch
      %662 = sbr.rel (0) target = $region45
    $region44: #{tpu_custom_call.1} parent=1 // pred_region
      %663 = dma.done [#allocation4], 16
    $region45: #{tpu_custom_call.1} parent=1 // pred_fallthru
      _
    %664 = vsyncpa [#allocation4], 1

</llo_original>
